<compile_context>
chip_gen: v7x
topology: tpu7x:2x2x1
jax: 0.10.0
libtpu: 0.0.40
codegen_flags: <defaults>
</compile_context>

<pallas_src>
import functools
import math

import jax
import jax.numpy as jnp
from jax.experimental import pallas as pl
from jax.experimental.pallas import tpu as pltpu

LANE = 128


def _round_up(v, m):
    return (v + m - 1) // m * m


def _pad2d(a, rows, cols):
    """Zero-pad a 2-D array to (rows, cols); no-op when already that shape."""
    r, c = a.shape
    if r == rows and c == cols:
        return a
    return jnp.pad(a, ((0, rows - r), (0, cols - c)))


def _vmem_capacity_bytes():
    try:
        return int(pltpu.get_tpu_info().vmem_capacity_bytes)
    except Exception:
        return 64 * 1024 * 1024  # conservative (v7x-sized) fallback


def _vmem_bytes(block_b, d_in_p, d_mid_p, d_out_p, x_item, w_item, training):
    """Resident-VMEM estimate for one grid step.

    Weights/biases are single-buffered (constant index_map, pl.Buffered(1));
    per-batch-tile streams (x, mask, out) are double-buffered by the pipeline;
    the f32 intermediate h lives once.
    """
    weights = (d_in_p * d_mid_p + d_mid_p * d_out_p) * w_item
    biases = (d_mid_p + d_out_p) * 4
    acts = (block_b * d_in_p + block_b * d_out_p) * x_item * 2
    mask = block_b * d_mid_p * 1 * 2 if training else 0
    inter = block_b * d_mid_p * 4
    return weights + biases + acts + mask + inter + (2 << 20)  # +2 MiB headroom


def _mlp_kernel(*refs, training: bool):
    if training:
        x_ref, w1_ref, b1_ref, w2_ref, b2_ref, mask_ref, o_ref = refs
    else:
        x_ref, w1_ref, b1_ref, w2_ref, b2_ref, o_ref = refs
        mask_ref = None

    cdt = w1_ref.dtype  # MXU compute dtype (bf16 by default), f32 accumulation

    # Linear 1: [TB, D_in] @ [D_in, M] -> f32 [TB, M].
    h = jnp.dot(x_ref[...].astype(cdt), w1_ref[...],
                preferred_element_type=jnp.float32)
    h = h + b1_ref[...].astype(jnp.float32)  # b1 is [1, M], broadcasts over rows

    if training:
        # Dropout(0.5), inverted scaling: kept -> 2*h, dropped -> 0 (VPU select).
        h = jnp.where(mask_ref[...] != 0, h * 2.0, 0.0)
    h = jnp.maximum(h, 0.0)  # ReLU

    # Linear 2: drop the intermediate to the weight dtype (bf16 MXU rate),
    # keep f32 accumulation.
    y = jnp.dot(h.astype(cdt), w2_ref[...], preferred_element_type=jnp.float32)
    y = y + b2_ref[...].astype(jnp.float32)
    o_ref[...] = jnp.maximum(y, 0.0).astype(o_ref.dtype)  # final ReLU


def prepare_params(w1, b1, w2, b2, *, compute_dtype=jnp.bfloat16):
    """Pad feature dims to 128-lane multiples and cast weights to the MXU compute
    dtype ONCE, outside the per-call hot path.  Biases stay f32 (tiny & exact)."""
    d_in, d_mid = w1.shape
    d_out = w2.shape[1]
    d_in_p, d_mid_p, d_out_p = (_round_up(d, LANE) for d in (d_in, d_mid, d_out))
    # TODO(synk): on v6e/v7x (256x256 MXUs) rounding d_mid/d_out to 256 helps once
    # the kernel becomes MXU-bound; kept at 128 here (memory-bound regime).
    return {
        "w1": _pad2d(w1.astype(compute_dtype), d_in_p, d_mid_p),
        "b1": _pad2d(b1.reshape(1, -1).astype(jnp.float32), 1, d_mid_p),
        "w2": _pad2d(w2.astype(compute_dtype), d_mid_p, d_out_p),
        "b2": _pad2d(b2.reshape(1, -1).astype(jnp.float32), 1, d_out_p),
        "dims": (d_in, d_mid, d_out),
        "padded_dims": (d_in_p, d_mid_p, d_out_p),
    }


def mlp_forward(x, params, *, dropout_mask=None, block_b=None):
    """y = relu(dropout_0.5(x @ W1 + b1) @ W2 + b2).

    x: [B, d_in]; params: output of prepare_params().
    dropout_mask: optional bool/int [B, d_mid] keep-mask -> training mode.
                  None -> eval mode (nn.Dropout is the identity under .eval()).
    """
    training = dropout_mask is not None
    B, d_in = x.shape
    d_in_r, d_mid, d_out = params["dims"]
    assert d_in == d_in_r, "x feature dim does not match the prepared params"
    d_in_p, d_mid_p, d_out_p = params["padded_dims"]

    x_item = jnp.dtype(x.dtype).itemsize
    w_item = jnp.dtype(params["w1"].dtype).itemsize

    # Batch tile: dtype-aware sublane multiple + per-generation VMEM budget.
    sub = max(8, 32 // x_item)      # 8 for f32, 16 for bf16 activations
    if training:
        sub = max(sub, 32)          # int8 mask packs 4 rows per sublane

    vmem_cap = _vmem_capacity_bytes()
    budget = min(vmem_cap * 5 // 8, 64 * 1024 * 1024)      # ~40 MiB v7x, 64 MiB v5e/v6e
    vmem_limit = min(vmem_cap * 3 // 4, 96 * 1024 * 1024)  # ~48 MiB v7x, 96 MiB v5e/v6e

    bb = 2048 if block_b is None else int(block_b)
    bb = min(bb, _round_up(B, sub))
    bb = max(sub, _round_up(bb, sub))
    # User-supplied block_b is also validated against the per-generation budget.
    while bb > sub and _vmem_bytes(bb, d_in_p, d_mid_p, d_out_p,
                                   x_item, w_item, training) > budget:
        bb = max(sub, _round_up(bb // 2, sub))
    # v7x has 2 TensorCores sharing the "parallel" grid axis: give both work when
    # the batch is large enough (keep tiles >= 256 rows). Harmless on v5e/v6e.
    if bb >= B and B > 512:
        bb = max(256, _round_up(-(-B // 2), sub))
    block_b = bb
    B_p = _round_up(B, block_b)
    # TODO(synk): handle the batch tail as a partial final tile instead of padding.

    x_p = _pad2d(x, B_p, d_in_p)  # guarded no-op when already aligned

    args = [x_p, params["w1"], params["b1"], params["w2"], params["b2"]]
    if training:
        assert dropout_mask.shape == (B, d_mid)
        mask_i8 = dropout_mask.astype(jnp.int8)  # 1 B/elem keep-mask stream
        args.append(_pad2d(mask_i8, B_p, d_mid_p))

    def _build_in_specs(single_buffer_weights):
        if single_buffer_weights:
            # Constant index_map -> no second pipeline buffer needed.
            w_spec = lambda shape: pl.BlockSpec(shape, lambda i: (0, 0),
                                                pipeline_mode=pl.Buffered(1))
        else:
            w_spec = lambda shape: pl.BlockSpec(shape, lambda i: (0, 0))
        specs = [
            pl.BlockSpec((block_b, d_in_p), lambda i: (i, 0)),
            w_spec((d_in_p, d_mid_p)),
            w_spec((1, d_mid_p)),
            w_spec((d_mid_p, d_out_p)),
            w_spec((1, d_out_p)),
        ]
        if training:
            specs.append(pl.BlockSpec((block_b, d_mid_p), lambda i: (i, 0)))
        return specs

    flops = 2 * B_p * (d_in_p * d_mid_p + d_mid_p * d_out_p)
    bytes_accessed = (B_p * d_in_p * x_item                              # x
                      + (d_in_p * d_mid_p + d_mid_p * d_out_p) * w_item  # weights
                      + (d_mid_p + d_out_p) * 4                          # biases
                      + (B_p * d_mid_p if training else 0)               # int8 mask
                      + B_p * d_out_p * x_item)                          # out

    kernel = functools.partial(_mlp_kernel, training=training)

    def _run(single_buffer_weights):
        return pl.pallas_call(
            kernel,
            out_shape=jax.ShapeDtypeStruct((B_p, d_out_p), x.dtype),
            grid=(B_p // block_b,),
            in_specs=_build_in_specs(single_buffer_weights),
            out_specs=pl.BlockSpec((block_b, d_out_p), lambda i: (i, 0)),
            compiler_params=pltpu.CompilerParams(
                dimension_semantics=("parallel",),  # batch tiles are independent
                vmem_limit_bytes=int(vmem_limit),
            ),
            cost_estimate=pl.CostEstimate(
                flops=int(flops), transcendentals=0,
                bytes_accessed=int(bytes_accessed)),
        )(*args)

    try:
        out_p = _run(True)
    except Exception:
        # Conservative fallback if single-buffered (pl.Buffered(1)) weight specs
        # are rejected by this Pallas build: plain double-buffered weight specs.
        out_p = _run(False)

    return out_p[:B, :d_out]


def mlp_reference(x, w1, b1, w2, b2, *, dropout_mask=None,
                  compute_dtype=jnp.bfloat16):
    """Pure-JAX reference following the same bf16-matmul / f32-accumulate path."""
    cdt = compute_dtype
    h = jnp.dot(x.astype(cdt), w1.astype(cdt),
                preferred_element_type=jnp.float32) + b1.astype(jnp.float32)
    if dropout_mask is not None:
        h = jnp.where(dropout_mask, h * 2.0, 0.0)
    h = jnp.maximum(h, 0.0)
    y = jnp.dot(h.astype(cdt), w2.astype(cdt),
                preferred_element_type=jnp.float32) + b2.astype(jnp.float32)
    return jnp.maximum(y, 0.0).astype(x.dtype)


def init_params(key, input_size, middle_size, output_size):
    """Deterministic init matching nn.Linear's default U(-1/sqrt(fan_in), ...)."""
    k1, k2, k3, k4 = jax.random.split(key, 4)
    lim1 = 1.0 / math.sqrt(input_size)
    lim2 = 1.0 / math.sqrt(middle_size)
    w1 = jax.random.uniform(k1, (input_size, middle_size), jnp.float32, -lim1, lim1)
    b1 = jax.random.uniform(k2, (middle_size,), jnp.float32, -lim1, lim1)
    w2 = jax.random.uniform(k3, (middle_size, output_size), jnp.float32, -lim2, lim2)
    b2 = jax.random.uniform(k4, (output_size,), jnp.float32, -lim2, lim2)
    return w1, b1, w2, b2


if __name__ == "__main__":
    input_size, middle_size, output_size = 32, 64, 16
    batch = 8

    key = jax.random.PRNGKey(0)
    kx, kp, kd = jax.random.split(key, 3)
    x = jax.random.normal(kx, (batch, input_size), dtype=jnp.float32)
    w1, b1, w2, b2 = init_params(kp, input_size, middle_size, output_size)

    # Pad + bf16-cast the weights once, outside the per-call hot path.
    params = prepare_params(w1, b1, w2, b2, compute_dtype=jnp.bfloat16)

    # Eval mode (nn.Dropout is the identity under model.eval()).
    out = jax.block_until_ready(mlp_forward(x, params))
    ref = mlp_reference(x, w1, b1, w2, b2)
    assert out.shape == (batch, output_size)
    assert jnp.allclose(out, ref, atol=1e-2, rtol=1e-2), "eval mismatch vs reference"

    # Training mode: Dropout(p=0.5) with inverted scaling, identical keep-mask.
    mask = jax.random.bernoulli(kd, 0.5, (batch, middle_size))
    out_t = jax.block_until_ready(mlp_forward(x, params, dropout_mask=mask))
    ref_t = mlp_reference(x, w1, b1, w2, b2, dropout_mask=mask)
    assert out_t.shape == (batch, output_size)
    assert jnp.allclose(out_t, ref_t, atol=1e-2, rtol=1e-2), "train mismatch vs reference"

    print("KERNEL_OK")
</pallas_src>

<mosaic_0001>
module attributes {stable_mosaic.version = 11 : i64} {
  func.func @_mlp_kernel(%arg0: i32, %arg1: memref<8x128xf32, #tpu.memory_space<vmem>>, %arg2: memref<128x128xbf16, #tpu.memory_space<vmem>>, %arg3: memref<1x128xf32, #tpu.memory_space<vmem>>, %arg4: memref<128x128xbf16, #tpu.memory_space<vmem>>, %arg5: memref<1x128xf32, #tpu.memory_space<vmem>>, %arg6: memref<8x128xf32, #tpu.memory_space<vmem>>) attributes {dimension_semantics = [#tpu.dimension_semantics<parallel>], iteration_bounds = array<i64: 1>, scalar_prefetch = 0 : i64, scratch_operands = 0 : i64, tpu.core_type = #tpu.core_type<tc>, window_params = [{transform_indices = @transform_0, window_bounds = array<i64: 8, 128>}, {pipeline_mode = #tpu.pipeline_mode<synchronous>, transform_indices = @transform_1, window_bounds = array<i64: 128, 128>}, {pipeline_mode = #tpu.pipeline_mode<synchronous>, transform_indices = @transform_2, window_bounds = array<i64: 1, 128>}, {pipeline_mode = #tpu.pipeline_mode<synchronous>, transform_indices = @transform_3, window_bounds = array<i64: 128, 128>}, {pipeline_mode = #tpu.pipeline_mode<synchronous>, transform_indices = @transform_4, window_bounds = array<i64: 1, 128>}, {transform_indices = @transform_5, window_bounds = array<i64: 8, 128>}]} {
    %c0 = arith.constant 0 : index
    %c0_0 = arith.constant 0 : index
    %0 = vector.load %arg1[%c0, %c0_0] : memref<8x128xf32, #tpu.memory_space<vmem>>, vector<8x128xf32>
    %1 = arith.truncf %0 : vector<8x128xf32> to vector<8x128xbf16>
    %c0_1 = arith.constant 0 : index
    %c0_2 = arith.constant 0 : index
    %2 = vector.load %arg2[%c0_1, %c0_2] : memref<128x128xbf16, #tpu.memory_space<vmem>>, vector<128x128xbf16>
    %cst = arith.constant dense<0.000000e+00> : vector<8x128xf32>
    %3 = tpu.matmul %1, %2, %cst {dimension_numbers = #tpu.dot_dimension_numbers<[1], [0], [0], [1], [0, 0, 1, 1], [], []>} : vector<8x128xbf16>, vector<128x128xbf16>, vector<8x128xf32> -> vector<8x128xf32>
    %c0_3 = arith.constant 0 : index
    %c0_4 = arith.constant 0 : index
    %4 = vector.load %arg3[%c0_3, %c0_4] : memref<1x128xf32, #tpu.memory_space<vmem>>, vector<1x128xf32>
    %5 = vector.broadcast %4 : vector<1x128xf32> to vector<8x128xf32>
    %6 = arith.addf %3, %5 : vector<8x128xf32>
    %cst_5 = arith.constant 0.000000e+00 : f32
    %7 = vector.broadcast %cst_5 : f32 to vector<8x128xf32>
    %8 = arith.maximumf %6, %7 : vector<8x128xf32>
    %9 = arith.truncf %8 : vector<8x128xf32> to vector<8x128xbf16>
    %c0_6 = arith.constant 0 : index
    %c0_7 = arith.constant 0 : index
    %10 = vector.load %arg4[%c0_6, %c0_7] : memref<128x128xbf16, #tpu.memory_space<vmem>>, vector<128x128xbf16>
    %cst_8 = arith.constant dense<0.000000e+00> : vector<8x128xf32>
    %11 = tpu.matmul %9, %10, %cst_8 {dimension_numbers = #tpu.dot_dimension_numbers<[1], [0], [0], [1], [0, 0, 1, 1], [], []>} : vector<8x128xbf16>, vector<128x128xbf16>, vector<8x128xf32> -> vector<8x128xf32>
    %c0_9 = arith.constant 0 : index
    %c0_10 = arith.constant 0 : index
    %12 = vector.load %arg5[%c0_9, %c0_10] : memref<1x128xf32, #tpu.memory_space<vmem>>, vector<1x128xf32>
    %13 = vector.broadcast %12 : vector<1x128xf32> to vector<8x128xf32>
    %14 = arith.addf %11, %13 : vector<8x128xf32>
    %cst_11 = arith.constant 0.000000e+00 : f32
    %15 = vector.broadcast %cst_11 : f32 to vector<8x128xf32>
    %16 = arith.maximumf %14, %15 : vector<8x128xf32>
    %c0_12 = arith.constant 0 : index
    %c0_13 = arith.constant 0 : index
    %17 = vector.load %arg6[%c0_12, %c0_13] : memref<8x128xf32, #tpu.memory_space<vmem>>, vector<8x128xf32>
    tpu.vector_store %arg6[%c0_12, %c0_13], %16 {strides = array<i32>} : memref<8x128xf32, #tpu.memory_space<vmem>>, vector<8x128xf32>,
    return
  }
  func.func @transform_0(%arg0: i32) -> (i32, i32) {
    %c0_i32 = arith.constant 0 : i32
    %c0_i32_0 = arith.constant 0 : i32
    return %arg0, %c0_i32 : i32, i32
  }
  func.func @transform_1(%arg0: i32) -> (i32, i32) {
    %c0_i32 = arith.constant 0 : i32
    %c0_i32_0 = arith.constant 0 : i32
    %c0_i32_1 = arith.constant 0 : i32
    return %c0_i32, %c0_i32_0 : i32, i32
  }
  func.func @transform_2(%arg0: i32) -> (i32, i32) {
    %c0_i32 = arith.constant 0 : i32
    %c0_i32_0 = arith.constant 0 : i32
    %c0_i32_1 = arith.constant 0 : i32
    return %c0_i32, %c0_i32_0 : i32, i32
  }
  func.func @transform_3(%arg0: i32) -> (i32, i32) {
    %c0_i32 = arith.constant 0 : i32
    %c0_i32_0 = arith.constant 0 : i32
    %c0_i32_1 = arith.constant 0 : i32
    return %c0_i32, %c0_i32_0 : i32, i32
  }
  func.func @transform_4(%arg0: i32) -> (i32, i32) {
    %c0_i32 = arith.constant 0 : i32
    %c0_i32_0 = arith.constant 0 : i32
    %c0_i32_1 = arith.constant 0 : i32
    return %c0_i32, %c0_i32_0 : i32, i32
  }
  func.func @transform_5(%arg0: i32) -> (i32, i32) {
    %c0_i32 = arith.constant 0 : i32
    %c0_i32_0 = arith.constant 0 : i32
    return %arg0, %c0_i32 : i32, i32
  }
}

module attributes {stable_mosaic.version = 11 : i64} {
  func.func @_mlp_kernel(%arg0: i32, %arg1: memref<8x128xf32, #tpu.memory_space<vmem>>, %arg2: memref<128x128xbf16, #tpu.memory_space<vmem>>, %arg3: memref<1x128xf32, #tpu.memory_space<vmem>>, %arg4: memref<128x128xbf16, #tpu.memory_space<vmem>>, %arg5: memref<1x128xf32, #tpu.memory_space<vmem>>, %arg6: memref<8x128xf32, #tpu.memory_space<vmem>>) attributes {dimension_semantics = [#tpu.dimension_semantics<parallel>], iteration_bounds = array<i64: 1>, scalar_prefetch = 0 : i64, scratch_operands = 0 : i64, tpu.core_type = #tpu.core_type<tc>, window_params = [{transform_indices = @transform_0, window_bounds = array<i64: 8, 128>}, {pipeline_mode = #tpu.pipeline_mode<synchronous>, transform_indices = @transform_1, window_bounds = array<i64: 128, 128>}, {pipeline_mode = #tpu.pipeline_mode<synchronous>, transform_indices = @transform_2, window_bounds = array<i64: 1, 128>}, {pipeline_mode = #tpu.pipeline_mode<synchronous>, transform_indices = @transform_3, window_bounds = array<i64: 128, 128>}, {pipeline_mode = #tpu.pipeline_mode<synchronous>, transform_indices = @transform_4, window_bounds = array<i64: 1, 128>}, {transform_indices = @transform_5, window_bounds = array<i64: 8, 128>}]} {
    %c0 = arith.constant 0 : index
    %c0_0 = arith.constant 0 : index
    %0 = vector.load %arg1[%c0, %c0_0] : memref<8x128xf32, #tpu.memory_space<vmem>>, vector<8x128xf32>
    %1 = arith.truncf %0 : vector<8x128xf32> to vector<8x128xbf16>
    %c0_1 = arith.constant 0 : index
    %c0_2 = arith.constant 0 : index
    %2 = vector.load %arg2[%c0_1, %c0_2] : memref<128x128xbf16, #tpu.memory_space<vmem>>, vector<128x128xbf16>
    %cst = arith.constant dense<0.000000e+00> : vector<8x128xf32>
    %3 = tpu.matmul %1, %2, %cst {dimension_numbers = #tpu.dot_dimension_numbers<[1], [0], [0], [1], [0, 0, 1, 1], [], []>} : vector<8x128xbf16>, vector<128x128xbf16>, vector<8x128xf32> -> vector<8x128xf32>
    %c0_3 = arith.constant 0 : index
    %c0_4 = arith.constant 0 : index
    %4 = vector.load %arg3[%c0_3, %c0_4] : memref<1x128xf32, #tpu.memory_space<vmem>>, vector<1x128xf32>
    %5 = vector.broadcast %4 : vector<1x128xf32> to vector<8x128xf32>
    %6 = arith.addf %3, %5 : vector<8x128xf32>
    %cst_5 = arith.constant 0.000000e+00 : f32
    %7 = vector.broadcast %cst_5 : f32 to vector<8x128xf32>
    %8 = arith.maximumf %6, %7 : vector<8x128xf32>
    %9 = arith.truncf %8 : vector<8x128xf32> to vector<8x128xbf16>
    %c0_6 = arith.constant 0 : index
    %c0_7 = arith.constant 0 : index
    %10 = vector.load %arg4[%c0_6, %c0_7] : memref<128x128xbf16, #tpu.memory_space<vmem>>, vector<128x128xbf16>
    %cst_8 = arith.constant dense<0.000000e+00> : vector<8x128xf32>
    %11 = tpu.matmul %9, %10, %cst_8 {dimension_numbers = #tpu.dot_dimension_numbers<[1], [0], [0], [1], [0, 0, 1, 1], [], []>} : vector<8x128xbf16>, vector<128x128xbf16>, vector<8x128xf32> -> vector<8x128xf32>
    %c0_9 = arith.constant 0 : index
    %c0_10 = arith.constant 0 : index
    %12 = vector.load %arg5[%c0_9, %c0_10] : memref<1x128xf32, #tpu.memory_space<vmem>>, vector<1x128xf32>
    %13 = vector.broadcast %12 : vector<1x128xf32> to vector<8x128xf32>
    %14 = arith.addf %11, %13 : vector<8x128xf32>
    %cst_11 = arith.constant 0.000000e+00 : f32
    %15 = vector.broadcast %cst_11 : f32 to vector<8x128xf32>
    %16 = arith.maximumf %14, %15 : vector<8x128xf32>
    %c0_12 = arith.constant 0 : index
    %c0_13 = arith.constant 0 : index
    %17 = vector.load %arg6[%c0_12, %c0_13] : memref<8x128xf32, #tpu.memory_space<vmem>>, vector<8x128xf32>
    tpu.vector_store %arg6[%c0_12, %c0_13], %16 {strides = array<i32>} : memref<8x128xf32, #tpu.memory_space<vmem>>, vector<8x128xf32>,
    return
  }
  func.func @transform_0(%arg0: i32) -> (i32, i32) {
    %c0_i32 = arith.constant 0 : i32
    %c0_i32_0 = arith.constant 0 : i32
    return %arg0, %c0_i32 : i32, i32
  }
  func.func @transform_1(%arg0: i32) -> (i32, i32) {
    %c0_i32 = arith.constant 0 : i32
    %c0_i32_0 = arith.constant 0 : i32
    %c0_i32_1 = arith.constant 0 : i32
    return %c0_i32, %c0_i32_0 : i32, i32
  }
  func.func @transform_2(%arg0: i32) -> (i32, i32) {
    %c0_i32 = arith.constant 0 : i32
    %c0_i32_0 = arith.constant 0 : i32
    %c0_i32_1 = arith.constant 0 : i32
    return %c0_i32, %c0_i32_0 : i32, i32
  }
  func.func @transform_3(%arg0: i32) -> (i32, i32) {
    %c0_i32 = arith.constant 0 : i32
    %c0_i32_0 = arith.constant 0 : i32
    %c0_i32_1 = arith.constant 0 : i32
    return %c0_i32, %c0_i32_0 : i32, i32
  }
  func.func @transform_4(%arg0: i32) -> (i32, i32) {
    %c0_i32 = arith.constant 0 : i32
    %c0_i32_0 = arith.constant 0 : i32
    %c0_i32_1 = arith.constant 0 : i32
    return %c0_i32, %c0_i32_0 : i32, i32
  }
  func.func @transform_5(%arg0: i32) -> (i32, i32) {
    %c0_i32 = arith.constant 0 : i32
    %c0_i32_0 = arith.constant 0 : i32
    return %arg0, %c0_i32 : i32, i32
  }
}

</mosaic_0001>

<llo_original>
// kernel: tpu_custom_call.1
$region0: #{tpu_custom_call.1}
  #allocation0 [shape = 'u32[]', space=smem, size = 0x4, offset = 0x4, fixed_abs, tag = 'smem constant byte address 0x4 - core index']
  #allocation1 [shape = 'u32[144,128]{1,0:T(1,128)}', space=vmem, size = 0x12000, scoped, tag = 'internal scratch']
  %s0 = inlined_call_operand.hbm [shape: f32[8,128], index: 0, kind: input, shape index: {}]
  %s1 = inlined_call_operand.hbm [shape: bf16[128,128], index: 1, kind: input, shape index: {}]
  %s2 = inlined_call_operand.vmem [shape: f32[1,128], index: 2, kind: input, shape index: {}]
  %s3 = inlined_call_operand.hbm [shape: bf16[128,128], index: 3, kind: input, shape index: {}]
  %s4 = inlined_call_operand.vmem [shape: f32[1,128], index: 4, kind: input, shape index: {}]
  %s5 = inlined_call_operand.hbm [shape: f32[8,128], index: 5, kind: output, shape index: {}]
  %s6 = sld [smem:[#allocation0]]
  $region42: #{tpu_custom_call.1} parent=0
    _
  %s8 = ssub.s32 1, %s6
  %s9 = scalar_select 0, %s8, %s6
  $region1: #{tpu_custom_call.1} parent=0
    #allocation2 [shape = 'u8[4096]{0}', space=vmem, size = 0x1000, scoped, tag = 'input window, operand 0, single buffered']
    #allocation3 [shape = 's32[1]{0}', space=sflag, size = 0x4, scoped, tag = 'scoped memory for tpu_custom_call.1']
    #allocation4 [shape = 's32[1]{0}', space=sflag, size = 0x4, scoped, tag = 'scoped memory for tpu_custom_call.1']
    #allocation5 [shape = 'u8[32768]{0}', space=vmem, size = 0x8000, scoped, tag = 'input window, operand 1, single buffered']
    #allocation6 [shape = 's32[1]{0}', space=sflag, size = 0x4, scoped, tag = 'scoped memory for tpu_custom_call.1']
    #allocation7 [shape = 'u8[32768]{0}', space=vmem, size = 0x8000, scoped, tag = 'input window, operand 3, single buffered']
    #allocation8 [shape = 'u8[4096]{0}', space=vmem, size = 0x1000, scoped, tag = 'output window, operand 0, single buffered']
    %10 = vsyncpa [#allocation3], 0
    %11 = vsyncpa [#allocation6], 0
    %12 = vsyncpa [#allocation4], 0
    // Predicated region
    $region2: #{tpu_custom_call.1} parent=1 // pred_check
      _
    $region3: #{tpu_custom_call.1} parent=1 // pred_check_branch
      %14 = sbr.rel (0) target = $region5
    $region4: #{tpu_custom_call.1} parent=1 // pred_region
      %s16 = ssub.s32 128, 128
      %17 = vsyncadd [#allocation3], %s16
      %s19 = sshll.u32 [#allocation2], 4
      %s20 = int_to_ptr.vmem [resolvable:$true] %s19
      %22 = dma.hbm_to_vmem [thread:$0]  %s0, 128, %s20, [#allocation3]
    $region5: #{tpu_custom_call.1} parent=1 // pred_fallthru
      _
    // Predicated region
    $region6: #{tpu_custom_call.1} parent=1 // pred_check
      _
    $region7: #{tpu_custom_call.1} parent=1 // pred_check_branch
      %24 = sbr.rel (0) target = $region9
    $region8: #{tpu_custom_call.1} parent=1 // pred_region
      %s26 = ssub.s32 1024, 1024
      %27 = vsyncadd [#allocation6], %s26
      %s28 = sshll.u32 [#allocation5], 4
      %s29 = int_to_ptr.vmem [resolvable:$true] %s28
      %34 = dma.hbm_to_vmem [thread:$0]  %s1, 1024, %s29, [#allocation6], 64, 64, 4
    $region9: #{tpu_custom_call.1} parent=1 // pred_fallthru
      _
    // Predicated region
    $region10: #{tpu_custom_call.1} parent=1 // pred_check
      _
    $region11: #{tpu_custom_call.1} parent=1 // pred_check_branch
      %36 = sbr.rel (0) target = $region13
    $region12: #{tpu_custom_call.1} parent=1 // pred_region
      _
    $region13: #{tpu_custom_call.1} parent=1 // pred_fallthru
      _
    // Predicated region
    $region14: #{tpu_custom_call.1} parent=1 // pred_check
      _
    $region15: #{tpu_custom_call.1} parent=1 // pred_check_branch
      %38 = sbr.rel (0) target = $region17
    $region16: #{tpu_custom_call.1} parent=1 // pred_region
      %s40 = ssub.s32 1024, 1024
      %41 = vsyncadd [#allocation6], %s40
      %s42 = sshll.u32 [#allocation7], 4
      %s43 = int_to_ptr.vmem [resolvable:$true] %s42
      %48 = dma.hbm_to_vmem [thread:$0]  %s3, 1024, %s43, [#allocation6], 64, 64, 4
    $region17: #{tpu_custom_call.1} parent=1 // pred_fallthru
      _
    // Predicated region
    $region18: #{tpu_custom_call.1} parent=1 // pred_check
      _
    $region19: #{tpu_custom_call.1} parent=1 // pred_check_branch
      %50 = sbr.rel (0) target = $region21
    $region20: #{tpu_custom_call.1} parent=1 // pred_region
      _
    $region21: #{tpu_custom_call.1} parent=1 // pred_fallthru
      _
    // Predicated region
    $region22: #{tpu_custom_call.1} parent=1 // pred_check
      _
    $region23: #{tpu_custom_call.1} parent=1 // pred_check_branch
      %52 = sbr.rel (0) target = $region25
    $region24: #{tpu_custom_call.1} parent=1 // pred_region
      %53 = dma.done [#allocation3], 128
    $region25: #{tpu_custom_call.1} parent=1 // pred_fallthru
      _
    // Predicated region
    $region26: #{tpu_custom_call.1} parent=1 // pred_check
      _
    $region27: #{tpu_custom_call.1} parent=1 // pred_check_branch
      %55 = sbr.rel (0) target = $region29
    $region28: #{tpu_custom_call.1} parent=1 // pred_region
      %56 = dma.done [#allocation6], 1024
    $region29: #{tpu_custom_call.1} parent=1 // pred_fallthru
      _
    // Predicated region
    $region30: #{tpu_custom_call.1} parent=1 // pred_check
      _
    $region31: #{tpu_custom_call.1} parent=1 // pred_check_branch
      %58 = sbr.rel (0) target = $region33
    $region32: #{tpu_custom_call.1} parent=1 // pred_region
      %59 = dma.done [#allocation6], 1024
    $region33: #{tpu_custom_call.1} parent=1 // pred_fallthru
      _
    %v61 = vld [vmem:[#allocation2] sm:$0xff]
    %v62 = vpack.c.bf16 %v61, %v61
    %v63 = vld [vmem:[#allocation5] sm:$0xf]
    %v64 = vld [vmem:[#allocation5 + $0x4] sm:$0xf]
    %v65 = vld [vmem:[#allocation5 + $0x8] sm:$0xf]
    %v66 = vld [vmem:[#allocation5 + $0xc] sm:$0xf]
    %v67 = vld [vmem:[#allocation5 + $0x10] sm:$0xf]
    %v68 = vld [vmem:[#allocation5 + $0x14] sm:$0xf]
    %v69 = vld [vmem:[#allocation5 + $0x18] sm:$0xf]
    %v70 = vld [vmem:[#allocation5 + $0x1c] sm:$0xf]
    %v71 = vld [vmem:[#allocation5 + $0x20] sm:$0xf]
    %v72 = vld [vmem:[#allocation5 + $0x24] sm:$0xf]
    %v73 = vld [vmem:[#allocation5 + $0x28] sm:$0xf]
    %v74 = vld [vmem:[#allocation5 + $0x2c] sm:$0xf]
    %v75 = vld [vmem:[#allocation5 + $0x30] sm:$0xf]
    %v76 = vld [vmem:[#allocation5 + $0x34] sm:$0xf]
    %v77 = vld [vmem:[#allocation5 + $0x38] sm:$0xf]
    %v78 = vld [vmem:[#allocation5 + $0x3c] sm:$0xf]
    %v79 = vld [vmem:[%s2] sm:$0x1]
    %v81 = vlaneseq
    %v82 = vshrl.u32 %v81, 7
    %v83 = vsub.s32 0, %v82
    %v84 = vrot.slane %v79, %v83
    %v102 = vunpack.c.l.b16 %v63
    %v103 = vunpack.c.l.b16 %v64
    %v104 = vunpack.c.l.b16 %v65
    %v105 = vunpack.c.l.b16 %v66
    %v106 = vunpack.c.l.b16 %v67
    %v107 = vunpack.c.l.b16 %v68
    %v108 = vunpack.c.l.b16 %v69
    %v109 = vunpack.c.l.b16 %v70
    %v110 = vunpack.c.l.b16 %v71
    %v111 = vunpack.c.l.b16 %v72
    %v112 = vunpack.c.l.b16 %v73
    %v113 = vunpack.c.l.b16 %v74
    %v114 = vunpack.c.l.b16 %v75
    %v115 = vunpack.c.l.b16 %v76
    %v116 = vunpack.c.l.b16 %v77
    %v117 = vunpack.c.l.b16 %v78
    %v118 = vpack.c.b16 %v103, %v102
    %v119 = vpack.c.b16 %v105, %v104
    %v120 = vpack.c.b16 %v107, %v106
    %v121 = vpack.c.b16 %v109, %v108
    %v122 = vpack.c.b16 %v111, %v110
    %v123 = vpack.c.b16 %v113, %v112
    %v124 = vpack.c.b16 %v115, %v114
    %v125 = vpack.c.b16 %v117, %v116
    %134 = vmatprep.subr.bf16.mxu0 0
    %135 = vmatpush1.bf16.msra.mxu0 %v118
    %136 = vmatprep.subr.bf16.mxu0 0
    %137 = vmatpush1.bf16.msra.mxu0 %v119
    %138 = vmatprep.subr.bf16.mxu0 0
    %139 = vmatpush1.bf16.msra.mxu0 %v120
    %140 = vmatprep.subr.bf16.mxu0 0
    %141 = vmatpush1.bf16.msra.mxu0 %v121
    %142 = vmatprep.subr.bf16.mxu0 0
    %143 = vmatpush1.bf16.msra.mxu0 %v122
    %144 = vmatprep.subr.bf16.mxu0 0
    %145 = vmatpush1.bf16.msra.mxu0 %v123
    %146 = vmatprep.subr.bf16.mxu0 0
    %147 = vmatpush1.bf16.msra.mxu0 %v124
    %148 = vmatprep.subr.bf16.mxu0 0
    %149 = vmatpush1.bf16.msra.mxu0 %v125
    %150 = vmatprep.subr.bf16.mxu0 0
    %151 = vmatpush1.bf16.msra.mxu0 0
    %152 = vmatprep.subr.bf16.mxu0 0
    %153 = vmatpush1.bf16.msra.mxu0 0
    %154 = vmatprep.subr.bf16.mxu0 0
    %155 = vmatpush1.bf16.msra.mxu0 0
    %156 = vmatprep.subr.bf16.mxu0 0
    %157 = vmatpush1.bf16.msra.mxu0 0
    %158 = vmatprep.subr.bf16.mxu0 0
    %159 = vmatpush1.bf16.msra.mxu0 0
    %160 = vmatprep.subr.bf16.mxu0 0
    %161 = vmatpush1.bf16.msra.mxu0 0
    %162 = vmatprep.subr.bf16.mxu0 0
    %163 = vmatpush1.bf16.msra.mxu0 0
    %164 = vmatprep.subr.bf16.mxu0 0
    %165 = vmatpush1.bf16.msra.mxu0 0
    %166 = vmatprep.mubr.bf16.mxu0 0
    %167 = vmatmul.mubr.bf16.gmra.mrb[0].mxu0 %v62
    %v168 = vpop.f32.mrb[0].mxu0
    %v169 = vadd.f32 %v84, %v168
    %v170 = vpop.f32.mrb[0].mxu0
    %v171 = vpop.f32.mrb[0].mxu0
    %v172 = vpop.f32.mrb[0].mxu0
    %173 = vdwg.mxu0
    %v174 = vmax.f32 %v169, 0.0
    %v175 = vpack.c.bf16 %v174, %v174
    %v176 = vld [vmem:[#allocation7] sm:$0xf]
    %v177 = vld [vmem:[#allocation7 + $0x4] sm:$0xf]
    %v178 = vld [vmem:[#allocation7 + $0x8] sm:$0xf]
    %v179 = vld [vmem:[#allocation7 + $0xc] sm:$0xf]
    %v180 = vld [vmem:[#allocation7 + $0x10] sm:$0xf]
    %v181 = vld [vmem:[#allocation7 + $0x14] sm:$0xf]
    %v182 = vld [vmem:[#allocation7 + $0x18] sm:$0xf]
    %v183 = vld [vmem:[#allocation7 + $0x1c] sm:$0xf]
    %v184 = vld [vmem:[#allocation7 + $0x20] sm:$0xf]
    %v185 = vld [vmem:[#allocation7 + $0x24] sm:$0xf]
    %v186 = vld [vmem:[#allocation7 + $0x28] sm:$0xf]
    %v187 = vld [vmem:[#allocation7 + $0x2c] sm:$0xf]
    %v188 = vld [vmem:[#allocation7 + $0x30] sm:$0xf]
    %v189 = vld [vmem:[#allocation7 + $0x34] sm:$0xf]
    %v190 = vld [vmem:[#allocation7 + $0x38] sm:$0xf]
    %v191 = vld [vmem:[#allocation7 + $0x3c] sm:$0xf]
    %v192 = vld [vmem:[%s4] sm:$0x1]
    %v194 = vlaneseq
    %v195 = vshrl.u32 %v194, 7
    %v196 = vsub.s32 0, %v195
    %v197 = vrot.slane %v192, %v196
    %v215 = vunpack.c.l.b16 %v176
    %v216 = vunpack.c.l.b16 %v177
    %v217 = vunpack.c.l.b16 %v178
    %v218 = vunpack.c.l.b16 %v179
    %v219 = vunpack.c.l.b16 %v180
    %v220 = vunpack.c.l.b16 %v181
    %v221 = vunpack.c.l.b16 %v182
    %v222 = vunpack.c.l.b16 %v183
    %v223 = vunpack.c.l.b16 %v184
    %v224 = vunpack.c.l.b16 %v185
    %v225 = vunpack.c.l.b16 %v186
    %v226 = vunpack.c.l.b16 %v187
    %v227 = vunpack.c.l.b16 %v188
    %v228 = vunpack.c.l.b16 %v189
    %v229 = vunpack.c.l.b16 %v190
    %v230 = vunpack.c.l.b16 %v191
    %v231 = vpack.c.b16 %v216, %v215
    %v232 = vpack.c.b16 %v218, %v217
    %v233 = vpack.c.b16 %v220, %v219
    %v234 = vpack.c.b16 %v222, %v221
    %v235 = vpack.c.b16 %v224, %v223
    %v236 = vpack.c.b16 %v226, %v225
    %v237 = vpack.c.b16 %v228, %v227
    %v238 = vpack.c.b16 %v230, %v229
    %247 = vmatprep.subr.bf16.mxu0 0
    %248 = vmatpush1.bf16.msra.mxu0 %v231
    %249 = vmatprep.subr.bf16.mxu0 0
    %250 = vmatpush1.bf16.msra.mxu0 %v232
    %251 = vmatprep.subr.bf16.mxu0 0
    %252 = vmatpush1.bf16.msra.mxu0 %v233
    %253 = vmatprep.subr.bf16.mxu0 0
    %254 = vmatpush1.bf16.msra.mxu0 %v234
    %255 = vmatprep.subr.bf16.mxu0 0
    %256 = vmatpush1.bf16.msra.mxu0 %v235
    %257 = vmatprep.subr.bf16.mxu0 0
    %258 = vmatpush1.bf16.msra.mxu0 %v236
    %259 = vmatprep.subr.bf16.mxu0 0
    %260 = vmatpush1.bf16.msra.mxu0 %v237
    %261 = vmatprep.subr.bf16.mxu0 0
    %262 = vmatpush1.bf16.msra.mxu0 %v238
    %263 = vmatprep.subr.bf16.mxu0 0
    %264 = vmatpush1.bf16.msra.mxu0 0
    %265 = vmatprep.subr.bf16.mxu0 0
    %266 = vmatpush1.bf16.msra.mxu0 0
    %267 = vmatprep.subr.bf16.mxu0 0
    %268 = vmatpush1.bf16.msra.mxu0 0
    %269 = vmatprep.subr.bf16.mxu0 0
    %270 = vmatpush1.bf16.msra.mxu0 0
    %271 = vmatprep.subr.bf16.mxu0 0
    %272 = vmatpush1.bf16.msra.mxu0 0
    %273 = vmatprep.subr.bf16.mxu0 0
    %274 = vmatpush1.bf16.msra.mxu0 0
    %275 = vmatprep.subr.bf16.mxu0 0
    %276 = vmatpush1.bf16.msra.mxu0 0
    %277 = vmatprep.subr.bf16.mxu0 0
    %278 = vmatpush1.bf16.msra.mxu0 0
    %279 = vmatprep.mubr.bf16.mxu0 0
    %280 = vmatmul.mubr.bf16.gmra.mrb[0].mxu0 %v175
    %v281 = vpop.f32.mrb[0].mxu0
    %v282 = vadd.f32 %v197, %v281
    %v283 = vpop.f32.mrb[0].mxu0
    %v284 = vpop.f32.mrb[0].mxu0
    %v285 = vpop.f32.mrb[0].mxu0
    %286 = vdwg.mxu0
    %v287 = vmax.f32 %v282, 0.0
    %288 = vst [vmem:[#allocation8] sm:$0xff] %v287
    // Predicated region
    $region34: #{tpu_custom_call.1} parent=1 // pred_check
      _
    $region35: #{tpu_custom_call.1} parent=1 // pred_check_branch
      %290 = sbr.rel (0) target = $region37
    $region36: #{tpu_custom_call.1} parent=1 // pred_region
      %s292 = ssub.s32 128, 128
      %293 = vsyncadd [#allocation4], %s292
      %s295 = sshll.u32 [#allocation8], 4
      %s296 = int_to_ptr.vmem [resolvable:$true] %s295
      %298 = dma.vmem_to_hbm [thread:$0]  %s296, 128, %s5, [#allocation4]
    $region37: #{tpu_custom_call.1} parent=1 // pred_fallthru
      _
    // Predicated region
    $region38: #{tpu_custom_call.1} parent=1 // pred_check
      _
    $region39: #{tpu_custom_call.1} parent=1 // pred_check_branch
      %300 = sbr.rel (0) target = $region41
    $region40: #{tpu_custom_call.1} parent=1 // pred_region
      %301 = dma.done [#allocation4], 128
    $region41: #{tpu_custom_call.1} parent=1 // pred_fallthru
      _
    %302 = vsyncpa [#allocation3], 1
    %303 = vsyncpa [#allocation6], 1
    %304 = vsyncpa [#allocation4], 1

// kernel: tpu_custom_call.1
$region0: #{tpu_custom_call.1}
  #allocation0 [shape = 'u32[]', space=smem, size = 0x4, offset = 0x4, fixed_abs, tag = 'smem constant byte address 0x4 - core index']
  #allocation1 [shape = 'u32[144,128]{1,0:T(1,128)}', space=vmem, size = 0x12000, scoped, tag = 'internal scratch']
  %s0 = inlined_call_operand.hbm [shape: f32[8,128], index: 0, kind: input, shape index: {}]
  %s1 = inlined_call_operand.hbm [shape: bf16[128,128], index: 1, kind: input, shape index: {}]
  %s2 = inlined_call_operand.vmem [shape: f32[1,128], index: 2, kind: input, shape index: {}]
  %s3 = inlined_call_operand.hbm [shape: bf16[128,128], index: 3, kind: input, shape index: {}]
  %s4 = inlined_call_operand.vmem [shape: f32[1,128], index: 4, kind: input, shape index: {}]
  %s5 = inlined_call_operand.hbm [shape: f32[8,128], index: 5, kind: output, shape index: {}]
  %s6 = sld [smem:[#allocation0]]
  $region42: #{tpu_custom_call.1} parent=0
    _
  %s8 = ssub.s32 1, %s6
  %s9 = scalar_select 0, %s8, %s6
  $region1: #{tpu_custom_call.1} parent=0
    #allocation2 [shape = 'u8[4096]{0}', space=vmem, size = 0x1000, scoped, tag = 'input window, operand 0, single buffered']
    #allocation3 [shape = 's32[1]{0}', space=sflag, size = 0x4, scoped, tag = 'scoped memory for tpu_custom_call.1']
    #allocation4 [shape = 's32[1]{0}', space=sflag, size = 0x4, scoped, tag = 'scoped memory for tpu_custom_call.1']
    #allocation5 [shape = 'u8[32768]{0}', space=vmem, size = 0x8000, scoped, tag = 'input window, operand 1, single buffered']
    #allocation6 [shape = 's32[1]{0}', space=sflag, size = 0x4, scoped, tag = 'scoped memory for tpu_custom_call.1']
    #allocation7 [shape = 'u8[32768]{0}', space=vmem, size = 0x8000, scoped, tag = 'input window, operand 3, single buffered']
    #allocation8 [shape = 'u8[4096]{0}', space=vmem, size = 0x1000, scoped, tag = 'output window, operand 0, single buffered']
    %10 = vsyncpa [#allocation3], 0
    %11 = vsyncpa [#allocation6], 0
    %12 = vsyncpa [#allocation4], 0
    // Predicated region
    $region2: #{tpu_custom_call.1} parent=1 // pred_check
      _
    $region3: #{tpu_custom_call.1} parent=1 // pred_check_branch
      %14 = sbr.rel (0) target = $region5
    $region4: #{tpu_custom_call.1} parent=1 // pred_region
      %s16 = ssub.s32 128, 128
      %17 = vsyncadd [#allocation3], %s16
      %s19 = sshll.u32 [#allocation2], 4
      %s20 = int_to_ptr.vmem [resolvable:$true] %s19
      %22 = dma.hbm_to_vmem [thread:$0]  %s0, 128, %s20, [#allocation3]
    $region5: #{tpu_custom_call.1} parent=1 // pred_fallthru
      _
    // Predicated region
    $region6: #{tpu_custom_call.1} parent=1 // pred_check
      _
    $region7: #{tpu_custom_call.1} parent=1 // pred_check_branch
      %24 = sbr.rel (0) target = $region9
    $region8: #{tpu_custom_call.1} parent=1 // pred_region
      %s26 = ssub.s32 1024, 1024
      %27 = vsyncadd [#allocation6], %s26
      %s28 = sshll.u32 [#allocation5], 4
      %s29 = int_to_ptr.vmem [resolvable:$true] %s28
      %34 = dma.hbm_to_vmem [thread:$0]  %s1, 1024, %s29, [#allocation6], 64, 64, 4
    $region9: #{tpu_custom_call.1} parent=1 // pred_fallthru
      _
    // Predicated region
    $region10: #{tpu_custom_call.1} parent=1 // pred_check
      _
    $region11: #{tpu_custom_call.1} parent=1 // pred_check_branch
      %36 = sbr.rel (0) target = $region13
    $region12: #{tpu_custom_call.1} parent=1 // pred_region
      _
    $region13: #{tpu_custom_call.1} parent=1 // pred_fallthru
      _
    // Predicated region
    $region14: #{tpu_custom_call.1} parent=1 // pred_check
      _
    $region15: #{tpu_custom_call.1} parent=1 // pred_check_branch
      %38 = sbr.rel (0) target = $region17
    $region16: #{tpu_custom_call.1} parent=1 // pred_region
      %s40 = ssub.s32 1024, 1024
      %41 = vsyncadd [#allocation6], %s40
      %s42 = sshll.u32 [#allocation7], 4
      %s43 = int_to_ptr.vmem [resolvable:$true] %s42
      %48 = dma.hbm_to_vmem [thread:$0]  %s3, 1024, %s43, [#allocation6], 64, 64, 4
    $region17: #{tpu_custom_call.1} parent=1 // pred_fallthru
      _
    // Predicated region
    $region18: #{tpu_custom_call.1} parent=1 // pred_check
      _
    $region19: #{tpu_custom_call.1} parent=1 // pred_check_branch
      %50 = sbr.rel (0) target = $region21
    $region20: #{tpu_custom_call.1} parent=1 // pred_region
      _
    $region21: #{tpu_custom_call.1} parent=1 // pred_fallthru
      _
    // Predicated region
    $region22: #{tpu_custom_call.1} parent=1 // pred_check
      _
    $region23: #{tpu_custom_call.1} parent=1 // pred_check_branch
      %52 = sbr.rel (0) target = $region25
    $region24: #{tpu_custom_call.1} parent=1 // pred_region
      %53 = dma.done [#allocation3], 128
    $region25: #{tpu_custom_call.1} parent=1 // pred_fallthru
      _
    // Predicated region
    $region26: #{tpu_custom_call.1} parent=1 // pred_check
      _
    $region27: #{tpu_custom_call.1} parent=1 // pred_check_branch
      %55 = sbr.rel (0) target = $region29
    $region28: #{tpu_custom_call.1} parent=1 // pred_region
      %56 = dma.done [#allocation6], 1024
    $region29: #{tpu_custom_call.1} parent=1 // pred_fallthru
      _
    // Predicated region
    $region30: #{tpu_custom_call.1} parent=1 // pred_check
      _
    $region31: #{tpu_custom_call.1} parent=1 // pred_check_branch
      %58 = sbr.rel (0) target = $region33
    $region32: #{tpu_custom_call.1} parent=1 // pred_region
      %59 = dma.done [#allocation6], 1024
    $region33: #{tpu_custom_call.1} parent=1 // pred_fallthru
      _
    %v61 = vld [vmem:[#allocation2] sm:$0xff]
    %v62 = vpack.c.bf16 %v61, %v61
    %v63 = vld [vmem:[#allocation5] sm:$0xf]
    %v64 = vld [vmem:[#allocation5 + $0x4] sm:$0xf]
    %v65 = vld [vmem:[#allocation5 + $0x8] sm:$0xf]
    %v66 = vld [vmem:[#allocation5 + $0xc] sm:$0xf]
    %v67 = vld [vmem:[#allocation5 + $0x10] sm:$0xf]
    %v68 = vld [vmem:[#allocation5 + $0x14] sm:$0xf]
    %v69 = vld [vmem:[#allocation5 + $0x18] sm:$0xf]
    %v70 = vld [vmem:[#allocation5 + $0x1c] sm:$0xf]
    %v71 = vld [vmem:[#allocation5 + $0x20] sm:$0xf]
    %v72 = vld [vmem:[#allocation5 + $0x24] sm:$0xf]
    %v73 = vld [vmem:[#allocation5 + $0x28] sm:$0xf]
    %v74 = vld [vmem:[#allocation5 + $0x2c] sm:$0xf]
    %v75 = vld [vmem:[#allocation5 + $0x30] sm:$0xf]
    %v76 = vld [vmem:[#allocation5 + $0x34] sm:$0xf]
    %v77 = vld [vmem:[#allocation5 + $0x38] sm:$0xf]
    %v78 = vld [vmem:[#allocation5 + $0x3c] sm:$0xf]
    %v79 = vld [vmem:[%s2] sm:$0x1]
    %v81 = vlaneseq
    %v82 = vshrl.u32 %v81, 7
    %v83 = vsub.s32 0, %v82
    %v84 = vrot.slane %v79, %v83
    %v102 = vunpack.c.l.b16 %v63
    %v103 = vunpack.c.l.b16 %v64
    %v104 = vunpack.c.l.b16 %v65
    %v105 = vunpack.c.l.b16 %v66
    %v106 = vunpack.c.l.b16 %v67
    %v107 = vunpack.c.l.b16 %v68
    %v108 = vunpack.c.l.b16 %v69
    %v109 = vunpack.c.l.b16 %v70
    %v110 = vunpack.c.l.b16 %v71
    %v111 = vunpack.c.l.b16 %v72
    %v112 = vunpack.c.l.b16 %v73
    %v113 = vunpack.c.l.b16 %v74
    %v114 = vunpack.c.l.b16 %v75
    %v115 = vunpack.c.l.b16 %v76
    %v116 = vunpack.c.l.b16 %v77
    %v117 = vunpack.c.l.b16 %v78
    %v118 = vpack.c.b16 %v103, %v102
    %v119 = vpack.c.b16 %v105, %v104
    %v120 = vpack.c.b16 %v107, %v106
    %v121 = vpack.c.b16 %v109, %v108
    %v122 = vpack.c.b16 %v111, %v110
    %v123 = vpack.c.b16 %v113, %v112
    %v124 = vpack.c.b16 %v115, %v114
    %v125 = vpack.c.b16 %v117, %v116
    %134 = vmatprep.subr.bf16.mxu0 0
    %135 = vmatpush1.bf16.msra.mxu0 %v118
    %136 = vmatprep.subr.bf16.mxu0 0
    %137 = vmatpush1.bf16.msra.mxu0 %v119
    %138 = vmatprep.subr.bf16.mxu0 0
    %139 = vmatpush1.bf16.msra.mxu0 %v120
    %140 = vmatprep.subr.bf16.mxu0 0
    %141 = vmatpush1.bf16.msra.mxu0 %v121
    %142 = vmatprep.subr.bf16.mxu0 0
    %143 = vmatpush1.bf16.msra.mxu0 %v122
    %144 = vmatprep.subr.bf16.mxu0 0
    %145 = vmatpush1.bf16.msra.mxu0 %v123
    %146 = vmatprep.subr.bf16.mxu0 0
    %147 = vmatpush1.bf16.msra.mxu0 %v124
    %148 = vmatprep.subr.bf16.mxu0 0
    %149 = vmatpush1.bf16.msra.mxu0 %v125
    %150 = vmatprep.subr.bf16.mxu0 0
    %151 = vmatpush1.bf16.msra.mxu0 0
    %152 = vmatprep.subr.bf16.mxu0 0
    %153 = vmatpush1.bf16.msra.mxu0 0
    %154 = vmatprep.subr.bf16.mxu0 0
    %155 = vmatpush1.bf16.msra.mxu0 0
    %156 = vmatprep.subr.bf16.mxu0 0
    %157 = vmatpush1.bf16.msra.mxu0 0
    %158 = vmatprep.subr.bf16.mxu0 0
    %159 = vmatpush1.bf16.msra.mxu0 0
    %160 = vmatprep.subr.bf16.mxu0 0
    %161 = vmatpush1.bf16.msra.mxu0 0
    %162 = vmatprep.subr.bf16.mxu0 0
    %163 = vmatpush1.bf16.msra.mxu0 0
    %164 = vmatprep.subr.bf16.mxu0 0
    %165 = vmatpush1.bf16.msra.mxu0 0
    %166 = vmatprep.mubr.bf16.mxu0 0
    %167 = vmatmul.mubr.bf16.gmra.mrb[0].mxu0 %v62
    %v168 = vpop.f32.mrb[0].mxu0
    %v169 = vadd.f32 %v84, %v168
    %v170 = vpop.f32.mrb[0].mxu0
    %v171 = vpop.f32.mrb[0].mxu0
    %v172 = vpop.f32.mrb[0].mxu0
    %173 = vdwg.mxu0
    %v174 = vmax.f32 %v169, 0.0
    %v175 = vpack.c.bf16 %v174, %v174
    %v176 = vld [vmem:[#allocation7] sm:$0xf]
    %v177 = vld [vmem:[#allocation7 + $0x4] sm:$0xf]
    %v178 = vld [vmem:[#allocation7 + $0x8] sm:$0xf]
    %v179 = vld [vmem:[#allocation7 + $0xc] sm:$0xf]
    %v180 = vld [vmem:[#allocation7 + $0x10] sm:$0xf]
    %v181 = vld [vmem:[#allocation7 + $0x14] sm:$0xf]
    %v182 = vld [vmem:[#allocation7 + $0x18] sm:$0xf]
    %v183 = vld [vmem:[#allocation7 + $0x1c] sm:$0xf]
    %v184 = vld [vmem:[#allocation7 + $0x20] sm:$0xf]
    %v185 = vld [vmem:[#allocation7 + $0x24] sm:$0xf]
    %v186 = vld [vmem:[#allocation7 + $0x28] sm:$0xf]
    %v187 = vld [vmem:[#allocation7 + $0x2c] sm:$0xf]
    %v188 = vld [vmem:[#allocation7 + $0x30] sm:$0xf]
    %v189 = vld [vmem:[#allocation7 + $0x34] sm:$0xf]
    %v190 = vld [vmem:[#allocation7 + $0x38] sm:$0xf]
    %v191 = vld [vmem:[#allocation7 + $0x3c] sm:$0xf]
    %v192 = vld [vmem:[%s4] sm:$0x1]
    %v194 = vlaneseq
    %v195 = vshrl.u32 %v194, 7
    %v196 = vsub.s32 0, %v195
    %v197 = vrot.slane %v192, %v196
    %v215 = vunpack.c.l.b16 %v176
    %v216 = vunpack.c.l.b16 %v177
    %v217 = vunpack.c.l.b16 %v178
    %v218 = vunpack.c.l.b16 %v179
    %v219 = vunpack.c.l.b16 %v180
    %v220 = vunpack.c.l.b16 %v181
    %v221 = vunpack.c.l.b16 %v182
    %v222 = vunpack.c.l.b16 %v183
    %v223 = vunpack.c.l.b16 %v184
    %v224 = vunpack.c.l.b16 %v185
    %v225 = vunpack.c.l.b16 %v186
    %v226 = vunpack.c.l.b16 %v187
    %v227 = vunpack.c.l.b16 %v188
    %v228 = vunpack.c.l.b16 %v189
    %v229 = vunpack.c.l.b16 %v190
    %v230 = vunpack.c.l.b16 %v191
    %v231 = vpack.c.b16 %v216, %v215
    %v232 = vpack.c.b16 %v218, %v217
    %v233 = vpack.c.b16 %v220, %v219
    %v234 = vpack.c.b16 %v222, %v221
    %v235 = vpack.c.b16 %v224, %v223
    %v236 = vpack.c.b16 %v226, %v225
    %v237 = vpack.c.b16 %v228, %v227
    %v238 = vpack.c.b16 %v230, %v229
    %247 = vmatprep.subr.bf16.mxu0 0
    %248 = vmatpush1.bf16.msra.mxu0 %v231
    %249 = vmatprep.subr.bf16.mxu0 0
    %250 = vmatpush1.bf16.msra.mxu0 %v232
    %251 = vmatprep.subr.bf16.mxu0 0
    %252 = vmatpush1.bf16.msra.mxu0 %v233
    %253 = vmatprep.subr.bf16.mxu0 0
    %254 = vmatpush1.bf16.msra.mxu0 %v234
    %255 = vmatprep.subr.bf16.mxu0 0
    %256 = vmatpush1.bf16.msra.mxu0 %v235
    %257 = vmatprep.subr.bf16.mxu0 0
    %258 = vmatpush1.bf16.msra.mxu0 %v236
    %259 = vmatprep.subr.bf16.mxu0 0
    %260 = vmatpush1.bf16.msra.mxu0 %v237
    %261 = vmatprep.subr.bf16.mxu0 0
    %262 = vmatpush1.bf16.msra.mxu0 %v238
    %263 = vmatprep.subr.bf16.mxu0 0
    %264 = vmatpush1.bf16.msra.mxu0 0
    %265 = vmatprep.subr.bf16.mxu0 0
    %266 = vmatpush1.bf16.msra.mxu0 0
    %267 = vmatprep.subr.bf16.mxu0 0
    %268 = vmatpush1.bf16.msra.mxu0 0
    %269 = vmatprep.subr.bf16.mxu0 0
    %270 = vmatpush1.bf16.msra.mxu0 0
    %271 = vmatprep.subr.bf16.mxu0 0
    %272 = vmatpush1.bf16.msra.mxu0 0
    %273 = vmatprep.subr.bf16.mxu0 0
    %274 = vmatpush1.bf16.msra.mxu0 0
    %275 = vmatprep.subr.bf16.mxu0 0
    %276 = vmatpush1.bf16.msra.mxu0 0
    %277 = vmatprep.subr.bf16.mxu0 0
    %278 = vmatpush1.bf16.msra.mxu0 0
    %279 = vmatprep.mubr.bf16.mxu0 0
    %280 = vmatmul.mubr.bf16.gmra.mrb[0].mxu0 %v175
    %v281 = vpop.f32.mrb[0].mxu0
    %v282 = vadd.f32 %v197, %v281
    %v283 = vpop.f32.mrb[0].mxu0
    %v284 = vpop.f32.mrb[0].mxu0
    %v285 = vpop.f32.mrb[0].mxu0
    %286 = vdwg.mxu0
    %v287 = vmax.f32 %v282, 0.0
    %288 = vst [vmem:[#allocation8] sm:$0xff] %v287
    // Predicated region
    $region34: #{tpu_custom_call.1} parent=1 // pred_check
      _
    $region35: #{tpu_custom_call.1} parent=1 // pred_check_branch
      %290 = sbr.rel (0) target = $region37
    $region36: #{tpu_custom_call.1} parent=1 // pred_region
      %s292 = ssub.s32 128, 128
      %293 = vsyncadd [#allocation4], %s292
      %s295 = sshll.u32 [#allocation8], 4
      %s296 = int_to_ptr.vmem [resolvable:$true] %s295
      %298 = dma.vmem_to_hbm [thread:$0]  %s296, 128, %s5, [#allocation4]
    $region37: #{tpu_custom_call.1} parent=1 // pred_fallthru
      _
    // Predicated region
    $region38: #{tpu_custom_call.1} parent=1 // pred_check
      _
    $region39: #{tpu_custom_call.1} parent=1 // pred_check_branch
      %300 = sbr.rel (0) target = $region41
    $region40: #{tpu_custom_call.1} parent=1 // pred_region
      %301 = dma.done [#allocation4], 128
    $region41: #{tpu_custom_call.1} parent=1 // pred_fallthru
      _
    %302 = vsyncpa [#allocation3], 1
    %303 = vsyncpa [#allocation6], 1
    %304 = vsyncpa [#allocation4], 1

</llo_original>
